<compile_context>
chip_gen: v6e
topology: v6e:2x2x1
jax: 0.10.0
libtpu: 0.0.40
codegen_flags: <defaults>
</compile_context>

<pallas_src>
import functools

import numpy as np

import jax
import jax.numpy as jnp
from jax.experimental import pallas as pl
from jax.experimental.pallas import tpu as pltpu

_EPS = 1e-5


# --------------------------------- kernel ------------------------------------
def _basic_block_kernel(*refs, stride, has_downsample):
    """One batch-block (NB images) per grid step, channel-major lane layout.

    x_ref   : (NB, H, Cin*W)            input, lane-dense channel-major
    w1_ref  : (3, Cin*W, Cout*Wo)       banded conv1 weights, one slab per dy
    w2_ref  : (3, Cout*Wo, Cout*Wo)     banded conv2 weights, one slab per dy
    s*/b*   : (1, Cout*Wo)              BN scale / bias tiled to lane rows
    wd_ref  : (Cin*W, Cout*Wo)          banded residual 1x1 weights (optional)
    o_ref   : (NB, Ho, Cout*Wo)         output (128 lanes -> unmasked vst)
    xp_ref  : (NB, H+2, Cin*W)          VMEM scratch: conv1 H-halo
    y1p_ref : (NB, Ho+2, Cout*Wo)       VMEM scratch: conv2 H-halo
    """
    if has_downsample:
        (x_ref, w1_ref, w2_ref, s1_ref, b1_ref, s2_ref, b2_ref,
         wd_ref, sd_ref, bd_ref, o_ref, xp_ref, y1p_ref) = refs
    else:
        (x_ref, w1_ref, w2_ref, s1_ref, b1_ref, s2_ref, b2_ref,
         o_ref, xp_ref, y1p_ref) = refs
        wd_ref = sd_ref = bd_ref = None

    NB, Hp2, CWi = xp_ref.shape
    H = Hp2 - 2
    _, Hop2, CWo = y1p_ref.shape
    Ho = Hop2 - 2
    M = NB * Ho

    # Stage x into the H-halo scratch; only the border rows need zeroing
    # (interior is fully rewritten).  Not gated on program_id: with "parallel"
    # semantics another core's first step must also see zeroed borders.
    xp_ref[:, 0:1, :] = jnp.zeros((NB, 1, CWi), jnp.float32)
    xp_ref[:, H + 1:H + 2, :] = jnp.zeros((NB, 1, CWi), jnp.float32)
    xp_ref[:, 1:H + 1, :] = x_ref[...]

    def slab1(d):
        if stride == 1:
            s = xp_ref[:, d:d + Ho, :]
        else:
            # TODO(synk): stride-2 sublane-strided gather; a wrapper-side even/odd
            # row split would make these loads contiguous (branch not exercised
            # by the demo config).
            s = xp_ref[:, pl.ds(d, Ho, stride=stride), :]
        return s.reshape(M, CWi)

    # ---- conv1 (3x3, stride, pad=1): three accumulating MXU pushes ----------
    acc1 = jnp.dot(slab1(0), w1_ref[0], preferred_element_type=jnp.float32)
    acc1 = acc1 + jnp.dot(slab1(1), w1_ref[1],
                          preferred_element_type=jnp.float32)
    acc1 = acc1 + jnp.dot(slab1(2), w1_ref[2],
                          preferred_element_type=jnp.float32)
    y1 = jnp.maximum(acc1 * s1_ref[...] + b1_ref[...], 0.0)

    # ---- residual branch -----------------------------------------------------
    if has_downsample:
        # 1x1 conv (stride folded into the banded weights) + BN on the centre
        # (dy = 1) slab, i.e. the un-padded input rows.
        res = jnp.dot(slab1(1), wd_ref[...], preferred_element_type=jnp.float32)
        res = res * sd_ref[...] + bd_ref[...]
    else:
        # Identity skip: guaranteed Cin == Cout and stride == 1, so the
        # channel-major layouts coincide exactly.
        res = slab1(1)

    # ---- conv2 (3x3, stride 1, pad=1) + bn2 ----------------------------------
    y1p_ref[:, 0:1, :] = jnp.zeros((NB, 1, CWo), jnp.float32)
    y1p_ref[:, Ho + 1:Ho + 2, :] = jnp.zeros((NB, 1, CWo), jnp.float32)
    y1p_ref[:, 1:Ho + 1, :] = y1.reshape(NB, Ho, CWo)

    def slab2(d):
        return y1p_ref[:, d:d + Ho, :].reshape(M, CWo)

    y2 = jnp.dot(slab2(0), w2_ref[0], preferred_element_type=jnp.float32)
    y2 = y2 + jnp.dot(slab2(1), w2_ref[1], preferred_element_type=jnp.float32)
    y2 = y2 + jnp.dot(slab2(2), w2_ref[2], preferred_element_type=jnp.float32)
    y2 = y2 * s2_ref[...] + b2_ref[...]

    o_ref[...] = jnp.maximum(y2 + res, 0.0).reshape(NB, Ho, CWo)


# ------------------------- one-time weight preparation -----------------------
def _fold_bn(bn):
    gamma, beta, mean, var = bn
    scale = gamma / jnp.sqrt(var + _EPS)
    bias = beta - mean * scale
    return scale, bias


def _lane_rows(scale, bias, wo):
    # channel-major lane index = cout*Wo + wo  -> repeat each channel Wo times.
    rep = lambda v: jnp.repeat(v.astype(jnp.float32), wo).reshape(1, -1)
    return rep(scale), rep(bias)


def _band3(w_in, w_out, stride):
    """band[dx, wi, wo] = 1 iff input col wi feeds output col wo at tap dx."""
    band = np.zeros((3, w_in, w_out), np.float32)
    for dx in range(3):
        for wo in range(w_out):
            wi = stride * wo + dx - 1
            if 0 <= wi < w_in:
                band[dx, wi, wo] = 1.0
    return band


def _band1(w_in, w_out, stride):
    band = np.zeros((w_in, w_out), np.float32)
    for wo in range(w_out):
        wi = stride * wo
        if wi < w_in:
            band[wi, wo] = 1.0
    return band


def make_basic_block(params, *, is_downsample, input_hw):
    """Prepares banded weights once ("model-load time") and returns a jitted
    forward that only does the lane-preserving boundary transposes and the
    pallas_call."""
    H, W = input_hw
    Cin, Cout = params['w1'].shape[2], params['w1'].shape[3]
    has_downsample = bool(is_downsample or (Cin != Cout))
    stride = 2 if is_downsample else 1
    Ho = (H - 1) // stride + 1
    Wo = (W - 1) // stride + 1
    CWi = Cin * W
    CWo = Cout * Wo

    # Banded weights: absorb the dx taps and the pad=1 W-boundary zeros.
    # Band entries are 0/1, so w*big entries are exact copies of the original
    # weights (keeps rounding identical to the reference conv).
    band1 = _band3(W, Wo, stride)                                  # (3, W, Wo)
    w1big = jnp.einsum('dio,ydcq->yciqo', band1,
                       params['w1'].astype(jnp.float32))
    w1big = w1big.reshape(3, CWi, CWo)

    band2 = _band3(Wo, Wo, 1)
    w2big = jnp.einsum('dio,ydcq->yciqo', band2,
                       params['w2'].astype(jnp.float32))
    w2big = w2big.reshape(3, CWo, CWo)

    s1r, b1r = _lane_rows(*_fold_bn(params['bn1']), Wo)
    s2r, b2r = _lane_rows(*_fold_bn(params['bn2']), Wo)

    if has_downsample:
        bandd = _band1(W, Wo, stride)                              # (W, Wo)
        wd = params['wd'].reshape(Cin, Cout).astype(jnp.float32)
        wdbig = jnp.einsum('io,cq->ciqo', bandd, wd).reshape(CWi, CWo)
        sdr, bdr = _lane_rows(*_fold_bn(params['bnd']), Wo)
    else:
        wdbig = sdr = bdr = None

    kernel = functools.partial(_basic_block_kernel, stride=stride,
                               has_downsample=has_downsample)

    def fwd(x_nchw):
        N = x_nchw.shape[0]

        # Batch-block so M = NB*Ho fills the MXU rows (~256), NB | N.
        nb_cap = max(1, 256 // max(Ho, 1))
        NB = 1
        for cand in range(min(N, nb_cap), 0, -1):
            if N % cand == 0:
                NB = cand
                break

        # NCHW -> channel-major lane-dense (N, H, Cin*W): minor dim W is
        # untouched, so this is a sublane-only permute.
        x_cm = jnp.transpose(x_nchw, (0, 2, 1, 3)).astype(jnp.float32)
        x_cm = x_cm.reshape(N, H, CWi)

        full2 = lambda n: (0, 0)
        full3 = lambda n: (0, 0, 0)

        in_specs = [
            pl.BlockSpec((NB, H, CWi), lambda n: (n, 0, 0)),
            pl.BlockSpec((3, CWi, CWo), full3),
            pl.BlockSpec((3, CWo, CWo), full3),
            pl.BlockSpec((1, CWo), full2),
            pl.BlockSpec((1, CWo), full2),
            pl.BlockSpec((1, CWo), full2),
            pl.BlockSpec((1, CWo), full2),
        ]
        args = [x_cm, w1big, w2big, s1r, b1r, s2r, b2r]
        if has_downsample:
            in_specs += [
                pl.BlockSpec((CWi, CWo), full2),
                pl.BlockSpec((1, CWo), full2),
                pl.BlockSpec((1, CWo), full2),
            ]
            args += [wdbig, sdr, bdr]

        out_cm = pl.pallas_call(
            kernel,
            out_shape=jax.ShapeDtypeStruct((N, Ho, CWo), jnp.float32),
            grid_spec=pltpu.PrefetchScalarGridSpec(
                num_scalar_prefetch=0,
                grid=(N // NB,),
                in_specs=in_specs,
                out_specs=pl.BlockSpec((NB, Ho, CWo), lambda n: (n, 0, 0)),
                scratch_shapes=[
                    pltpu.VMEM((NB, H + 2, CWi), jnp.float32),   # conv1 halo
                    pltpu.VMEM((NB, Ho + 2, CWo), jnp.float32),  # conv2 halo
                ],
            ),
            # Batch blocks are independent -> megacore can split the grid.
            compiler_params=pltpu.CompilerParams(
                dimension_semantics=("parallel",)),
        )(*args)

        # (N, Ho, Cout*Wo) -> NCHW; again a sublane-only permute.
        out = out_cm.reshape(N, Ho, Cout, Wo)
        return jnp.transpose(out, (0, 2, 1, 3))

    return jax.jit(fwd)


# -------------------------- plain-JAX reference ------------------------------
def _bn_ref(x, bn):
    gamma, beta, mean, var = bn
    return (x - mean) / jnp.sqrt(var + _EPS) * gamma + beta


def basic_block_reference(x_nchw, params, *, is_downsample):
    Cin = x_nchw.shape[1]
    Cout = params['w1'].shape[-1]
    has_downsample = bool(is_downsample or (Cin != Cout))
    stride = 2 if is_downsample else 1
    x = jnp.transpose(x_nchw, (0, 2, 3, 1)).astype(jnp.float32)

    def conv(inp, w, s, pad):
        return jax.lax.conv_general_dilated(
            inp, w, window_strides=(s, s), padding=((pad, pad), (pad, pad)),
            dimension_numbers=('NHWC', 'HWIO', 'NHWC'))

    y = jax.nn.relu(_bn_ref(conv(x, params['w1'], stride, 1), params['bn1']))
    y = _bn_ref(conv(y, params['w2'], 1, 1), params['bn2'])
    if has_downsample:
        xr = _bn_ref(conv(x, params['wd'], stride, 0), params['bnd'])
    else:
        xr = x
    out = jax.nn.relu(xr + y)
    return jnp.transpose(out, (0, 3, 1, 2))


# ------------------------------ parameters -----------------------------------
def make_params(key, c_in, c_out):
    ks = jax.random.split(key, 6)

    def bn_params(k, c):
        k1, k2, k3, k4 = jax.random.split(k, 4)
        gamma = 1.0 + 0.1 * jax.random.normal(k1, (c,), jnp.float32)
        beta = 0.1 * jax.random.normal(k2, (c,), jnp.float32)
        mean = 0.1 * jax.random.normal(k3, (c,), jnp.float32)
        var = jax.random.uniform(k4, (c,), jnp.float32, minval=0.5, maxval=1.5)
        return gamma, beta, mean, var

    return {
        'w1': 0.2 * jax.random.normal(ks[0], (3, 3, c_in, c_out), jnp.float32),
        'w2': 0.2 * jax.random.normal(ks[1], (3, 3, c_out, c_out), jnp.float32),
        'wd': 0.2 * jax.random.normal(ks[2], (1, 1, c_in, c_out), jnp.float32),
        'bn1': bn_params(ks[3], c_out),
        'bn2': bn_params(ks[4], c_out),
        'bnd': bn_params(ks[5], c_out),
    }


if __name__ == "__main__":
    key = jax.random.PRNGKey(0)
    kx, kp = jax.random.split(key)

    # BasicBlock(c_in=4, c_out=8, is_downsample=False):
    # c_in != c_out -> 1x1 conv + BN downsample branch with stride 1.
    N, C_IN, C_OUT, H, W = 2, 4, 8, 16, 16
    IS_DOWNSAMPLE = False

    x = jax.random.normal(kx, (N, C_IN, H, W), jnp.float32)
    params = make_params(kp, C_IN, C_OUT)

    # Weight prep happens once here ("model load"); fwd is the hot path.
    block_fwd = make_basic_block(params, is_downsample=IS_DOWNSAMPLE,
                                 input_hw=(H, W))
    out = jax.block_until_ready(block_fwd(x))

    ref = basic_block_reference(x, params, is_downsample=IS_DOWNSAMPLE)
    assert out.shape == ref.shape == (N, C_OUT, H, W)
    assert jnp.allclose(out, ref, rtol=1e-4, atol=1e-4), (
        float(jnp.max(jnp.abs(out - ref))))

    print("KERNEL_OK")
</pallas_src>

<mosaic_0001>
module attributes {stable_mosaic.version = 11 : i64} {
  func.func @_basic_block_kernel(%arg0: i32, %arg1: memref<2x16x64xf32, #tpu.memory_space<vmem>>, %arg2: memref<3x64x128xf32, #tpu.memory_space<vmem>>, %arg3: memref<3x128x128xf32, #tpu.memory_space<vmem>>, %arg4: memref<1x128xf32, #tpu.memory_space<vmem>>, %arg5: memref<1x128xf32, #tpu.memory_space<vmem>>, %arg6: memref<1x128xf32, #tpu.memory_space<vmem>>, %arg7: memref<1x128xf32, #tpu.memory_space<vmem>>, %arg8: memref<64x128xf32, #tpu.memory_space<vmem>>, %arg9: memref<1x128xf32, #tpu.memory_space<vmem>>, %arg10: memref<1x128xf32, #tpu.memory_space<vmem>>, %arg11: memref<2x16x128xf32, #tpu.memory_space<vmem>>, %arg12: memref<2x18x64xf32, #tpu.memory_space<vmem>>, %arg13: memref<2x18x128xf32, #tpu.memory_space<vmem>>) attributes {dimension_semantics = [#tpu.dimension_semantics<parallel>], iteration_bounds = array<i64: 1>, scalar_prefetch = 0 : i64, scratch_operands = 2 : i64, tpu.core_type = #tpu.core_type<tc>, window_params = [{transform_indices = @transform_0, window_bounds = array<i64: 2, 16, 64>}, {pipeline_mode = #tpu.pipeline_mode<synchronous>, transform_indices = @transform_1, window_bounds = array<i64: 3, 64, 128>}, {pipeline_mode = #tpu.pipeline_mode<synchronous>, transform_indices = @transform_2, window_bounds = array<i64: 3, 128, 128>}, {pipeline_mode = #tpu.pipeline_mode<synchronous>, transform_indices = @transform_3, window_bounds = array<i64: 1, 128>}, {pipeline_mode = #tpu.pipeline_mode<synchronous>, transform_indices = @transform_4, window_bounds = array<i64: 1, 128>}, {pipeline_mode = #tpu.pipeline_mode<synchronous>, transform_indices = @transform_5, window_bounds = array<i64: 1, 128>}, {pipeline_mode = #tpu.pipeline_mode<synchronous>, transform_indices = @transform_6, window_bounds = array<i64: 1, 128>}, {pipeline_mode = #tpu.pipeline_mode<synchronous>, transform_indices = @transform_7, window_bounds = array<i64: 64, 128>}, {pipeline_mode = #tpu.pipeline_mode<synchronous>, transform_indices = @transform_8, window_bounds = array<i64: 1, 128>}, {pipeline_mode = #tpu.pipeline_mode<synchronous>, transform_indices = @transform_9, window_bounds = array<i64: 1, 128>}, {transform_indices = @transform_10, window_bounds = array<i64: 2, 16, 128>}]} {
    %cst = arith.constant 0.000000e+00 : f32
    %0 = vector.broadcast %cst : f32 to vector<2x1x64xf32>
    %c0 = arith.constant 0 : index
    %c0_0 = arith.constant 0 : index
    %c0_1 = arith.constant 0 : index
    %1 = vector.load %arg12[%c0, %c0_0, %c0_1] : memref<2x18x64xf32, #tpu.memory_space<vmem>>, vector<2x1x64xf32>
    tpu.vector_store %arg12[%c0, %c0_0, %c0_1], %0 {strides = array<i32>} : memref<2x18x64xf32, #tpu.memory_space<vmem>>, vector<2x1x64xf32>,
    %cst_2 = arith.constant 0.000000e+00 : f32
    %2 = vector.broadcast %cst_2 : f32 to vector<2x1x64xf32>
    %c0_3 = arith.constant 0 : index
    %c17 = arith.constant 17 : index
    %c0_4 = arith.constant 0 : index
    %3 = vector.load %arg12[%c0_3, %c17, %c0_4] : memref<2x18x64xf32, #tpu.memory_space<vmem>>, vector<2x1x64xf32>
    tpu.vector_store %arg12[%c0_3, %c17, %c0_4], %2 {strides = array<i32>} : memref<2x18x64xf32, #tpu.memory_space<vmem>>, vector<2x1x64xf32>,
    %c0_5 = arith.constant 0 : index
    %c0_6 = arith.constant 0 : index
    %c0_7 = arith.constant 0 : index
    %4 = vector.load %arg1[%c0_5, %c0_6, %c0_7] : memref<2x16x64xf32, #tpu.memory_space<vmem>>, vector<2x16x64xf32>
    %c0_8 = arith.constant 0 : index
    %c1 = arith.constant 1 : index
    %c0_9 = arith.constant 0 : index
    %5 = vector.load %arg12[%c0_8, %c1, %c0_9] : memref<2x18x64xf32, #tpu.memory_space<vmem>>, vector<2x16x64xf32>
    tpu.vector_store %arg12[%c0_8, %c1, %c0_9], %4 {strides = array<i32>} : memref<2x18x64xf32, #tpu.memory_space<vmem>>, vector<2x16x64xf32>,
    %c0_10 = arith.constant 0 : index
    %c0_11 = arith.constant 0 : index
    %c0_12 = arith.constant 0 : index
    %6 = vector.load %arg12[%c0_10, %c0_11, %c0_12] : memref<2x18x64xf32, #tpu.memory_space<vmem>>, vector<2x16x64xf32>
    %7 = vector.shape_cast %6 : vector<2x16x64xf32> to vector<32x64xf32>
    %c0_13 = arith.constant 0 : index
    %c0_14 = arith.constant 0 : index
    %c0_15 = arith.constant 0 : index
    %8 = vector.load %arg2[%c0_13, %c0_14, %c0_15] : memref<3x64x128xf32, #tpu.memory_space<vmem>>, vector<1x64x128xf32>
    %9 = vector.shape_cast %8 : vector<1x64x128xf32> to vector<64x128xf32>
    %cst_16 = arith.constant dense<0.000000e+00> : vector<32x128xf32>
    %10 = tpu.matmul %7, %9, %cst_16 {dimension_numbers = #tpu.dot_dimension_numbers<[1], [0], [0], [1], [0, 0, 1, 1], [], []>} : vector<32x64xf32>, vector<64x128xf32>, vector<32x128xf32> -> vector<32x128xf32>
    %c0_17 = arith.constant 0 : index
    %c1_18 = arith.constant 1 : index
    %c0_19 = arith.constant 0 : index
    %11 = vector.load %arg12[%c0_17, %c1_18, %c0_19] : memref<2x18x64xf32, #tpu.memory_space<vmem>>, vector<2x16x64xf32>
    %12 = vector.shape_cast %11 : vector<2x16x64xf32> to vector<32x64xf32>
    %c1_20 = arith.constant 1 : index
    %c0_21 = arith.constant 0 : index
    %c0_22 = arith.constant 0 : index
    %13 = vector.load %arg2[%c1_20, %c0_21, %c0_22] : memref<3x64x128xf32, #tpu.memory_space<vmem>>, vector<1x64x128xf32>
    %14 = vector.shape_cast %13 : vector<1x64x128xf32> to vector<64x128xf32>
    %cst_23 = arith.constant dense<0.000000e+00> : vector<32x128xf32>
    %15 = tpu.matmul %12, %14, %cst_23 {dimension_numbers = #tpu.dot_dimension_numbers<[1], [0], [0], [1], [0, 0, 1, 1], [], []>} : vector<32x64xf32>, vector<64x128xf32>, vector<32x128xf32> -> vector<32x128xf32>
    %16 = arith.addf %10, %15 : vector<32x128xf32>
    %c0_24 = arith.constant 0 : index
    %c2 = arith.constant 2 : index
    %c0_25 = arith.constant 0 : index
    %17 = vector.load %arg12[%c0_24, %c2, %c0_25] : memref<2x18x64xf32, #tpu.memory_space<vmem>>, vector<2x16x64xf32>
    %18 = vector.shape_cast %17 : vector<2x16x64xf32> to vector<32x64xf32>
    %c2_26 = arith.constant 2 : index
    %c0_27 = arith.constant 0 : index
    %c0_28 = arith.constant 0 : index
    %19 = vector.load %arg2[%c2_26, %c0_27, %c0_28] : memref<3x64x128xf32, #tpu.memory_space<vmem>>, vector<1x64x128xf32>
    %20 = vector.shape_cast %19 : vector<1x64x128xf32> to vector<64x128xf32>
    %cst_29 = arith.constant dense<0.000000e+00> : vector<32x128xf32>
    %21 = tpu.matmul %18, %20, %cst_29 {dimension_numbers = #tpu.dot_dimension_numbers<[1], [0], [0], [1], [0, 0, 1, 1], [], []>} : vector<32x64xf32>, vector<64x128xf32>, vector<32x128xf32> -> vector<32x128xf32>
    %22 = arith.addf %16, %21 : vector<32x128xf32>
    %c0_30 = arith.constant 0 : index
    %c0_31 = arith.constant 0 : index
    %23 = vector.load %arg4[%c0_30, %c0_31] : memref<1x128xf32, #tpu.memory_space<vmem>>, vector<1x128xf32>
    %24 = vector.broadcast %23 : vector<1x128xf32> to vector<32x128xf32>
    %25 = arith.mulf %22, %24 : vector<32x128xf32>
    %c0_32 = arith.constant 0 : index
    %c0_33 = arith.constant 0 : index
    %26 = vector.load %arg5[%c0_32, %c0_33] : memref<1x128xf32, #tpu.memory_space<vmem>>, vector<1x128xf32>
    %27 = vector.broadcast %26 : vector<1x128xf32> to vector<32x128xf32>
    %28 = arith.addf %25, %27 : vector<32x128xf32>
    %cst_34 = arith.constant 0.000000e+00 : f32
    %29 = vector.broadcast %cst_34 : f32 to vector<32x128xf32>
    %30 = arith.maximumf %28, %29 : vector<32x128xf32>
    %c0_35 = arith.constant 0 : index
    %c1_36 = arith.constant 1 : index
    %c0_37 = arith.constant 0 : index
    %31 = vector.load %arg12[%c0_35, %c1_36, %c0_37] : memref<2x18x64xf32, #tpu.memory_space<vmem>>, vector<2x16x64xf32>
    %32 = vector.shape_cast %31 : vector<2x16x64xf32> to vector<32x64xf32>
    %c0_38 = arith.constant 0 : index
    %c0_39 = arith.constant 0 : index
    %33 = vector.load %arg8[%c0_38, %c0_39] : memref<64x128xf32, #tpu.memory_space<vmem>>, vector<64x128xf32>
    %cst_40 = arith.constant dense<0.000000e+00> : vector<32x128xf32>
    %34 = tpu.matmul %32, %33, %cst_40 {dimension_numbers = #tpu.dot_dimension_numbers<[1], [0], [0], [1], [0, 0, 1, 1], [], []>} : vector<32x64xf32>, vector<64x128xf32>, vector<32x128xf32> -> vector<32x128xf32>
    %c0_41 = arith.constant 0 : index
    %c0_42 = arith.constant 0 : index
    %35 = vector.load %arg9[%c0_41, %c0_42] : memref<1x128xf32, #tpu.memory_space<vmem>>, vector<1x128xf32>
    %36 = vector.broadcast %35 : vector<1x128xf32> to vector<32x128xf32>
    %37 = arith.mulf %34, %36 : vector<32x128xf32>
    %c0_43 = arith.constant 0 : index
    %c0_44 = arith.constant 0 : index
    %38 = vector.load %arg10[%c0_43, %c0_44] : memref<1x128xf32, #tpu.memory_space<vmem>>, vector<1x128xf32>
    %39 = vector.broadcast %38 : vector<1x128xf32> to vector<32x128xf32>
    %40 = arith.addf %37, %39 : vector<32x128xf32>
    %cst_45 = arith.constant 0.000000e+00 : f32
    %41 = vector.broadcast %cst_45 : f32 to vector<2x1x128xf32>
    %c0_46 = arith.constant 0 : index
    %c0_47 = arith.constant 0 : index
    %c0_48 = arith.constant 0 : index
    %42 = vector.load %arg13[%c0_46, %c0_47, %c0_48] : memref<2x18x128xf32, #tpu.memory_space<vmem>>, vector<2x1x128xf32>
    tpu.vector_store %arg13[%c0_46, %c0_47, %c0_48], %41 {strides = array<i32>} : memref<2x18x128xf32, #tpu.memory_space<vmem>>, vector<2x1x128xf32>,
    %cst_49 = arith.constant 0.000000e+00 : f32
    %43 = vector.broadcast %cst_49 : f32 to vector<2x1x128xf32>
    %c0_50 = arith.constant 0 : index
    %c17_51 = arith.constant 17 : index
    %c0_52 = arith.constant 0 : index
    %44 = vector.load %arg13[%c0_50, %c17_51, %c0_52] : memref<2x18x128xf32, #tpu.memory_space<vmem>>, vector<2x1x128xf32>
    tpu.vector_store %arg13[%c0_50, %c17_51, %c0_52], %43 {strides = array<i32>} : memref<2x18x128xf32, #tpu.memory_space<vmem>>, vector<2x1x128xf32>,
    %45 = vector.shape_cast %30 : vector<32x128xf32> to vector<2x16x128xf32>
    %c0_53 = arith.constant 0 : index
    %c1_54 = arith.constant 1 : index
    %c0_55 = arith.constant 0 : index
    %46 = vector.load %arg13[%c0_53, %c1_54, %c0_55] : memref<2x18x128xf32, #tpu.memory_space<vmem>>, vector<2x16x128xf32>
    tpu.vector_store %arg13[%c0_53, %c1_54, %c0_55], %45 {strides = array<i32>} : memref<2x18x128xf32, #tpu.memory_space<vmem>>, vector<2x16x128xf32>,
    %c0_56 = arith.constant 0 : index
    %c0_57 = arith.constant 0 : index
    %c0_58 = arith.constant 0 : index
    %47 = vector.load %arg13[%c0_56, %c0_57, %c0_58] : memref<2x18x128xf32, #tpu.memory_space<vmem>>, vector<2x16x128xf32>
    %48 = vector.shape_cast %47 : vector<2x16x128xf32> to vector<32x128xf32>
    %c0_59 = arith.constant 0 : index
    %c0_60 = arith.constant 0 : index
    %c0_61 = arith.constant 0 : index
    %49 = vector.load %arg3[%c0_59, %c0_60, %c0_61] : memref<3x128x128xf32, #tpu.memory_space<vmem>>, vector<1x128x128xf32>
    %50 = vector.shape_cast %49 : vector<1x128x128xf32> to vector<128x128xf32>
    %cst_62 = arith.constant dense<0.000000e+00> : vector<32x128xf32>
    %51 = tpu.matmul %48, %50, %cst_62 {dimension_numbers = #tpu.dot_dimension_numbers<[1], [0], [0], [1], [0, 0, 1, 1], [], []>} : vector<32x128xf32>, vector<128x128xf32>, vector<32x128xf32> -> vector<32x128xf32>
    %c0_63 = arith.constant 0 : index
    %c1_64 = arith.constant 1 : index
    %c0_65 = arith.constant 0 : index
    %52 = vector.load %arg13[%c0_63, %c1_64, %c0_65] : memref<2x18x128xf32, #tpu.memory_space<vmem>>, vector<2x16x128xf32>
    %53 = vector.shape_cast %52 : vector<2x16x128xf32> to vector<32x128xf32>
    %c1_66 = arith.constant 1 : index
    %c0_67 = arith.constant 0 : index
    %c0_68 = arith.constant 0 : index
    %54 = vector.load %arg3[%c1_66, %c0_67, %c0_68] : memref<3x128x128xf32, #tpu.memory_space<vmem>>, vector<1x128x128xf32>
    %55 = vector.shape_cast %54 : vector<1x128x128xf32> to vector<128x128xf32>
    %cst_69 = arith.constant dense<0.000000e+00> : vector<32x128xf32>
    %56 = tpu.matmul %53, %55, %cst_69 {dimension_numbers = #tpu.dot_dimension_numbers<[1], [0], [0], [1], [0, 0, 1, 1], [], []>} : vector<32x128xf32>, vector<128x128xf32>, vector<32x128xf32> -> vector<32x128xf32>
    %57 = arith.addf %51, %56 : vector<32x128xf32>
    %c0_70 = arith.constant 0 : index
    %c2_71 = arith.constant 2 : index
    %c0_72 = arith.constant 0 : index
    %58 = vector.load %arg13[%c0_70, %c2_71, %c0_72] : memref<2x18x128xf32, #tpu.memory_space<vmem>>, vector<2x16x128xf32>
    %59 = vector.shape_cast %58 : vector<2x16x128xf32> to vector<32x128xf32>
    %c2_73 = arith.constant 2 : index
    %c0_74 = arith.constant 0 : index
    %c0_75 = arith.constant 0 : index
    %60 = vector.load %arg3[%c2_73, %c0_74, %c0_75] : memref<3x128x128xf32, #tpu.memory_space<vmem>>, vector<1x128x128xf32>
    %61 = vector.shape_cast %60 : vector<1x128x128xf32> to vector<128x128xf32>
    %cst_76 = arith.constant dense<0.000000e+00> : vector<32x128xf32>
    %62 = tpu.matmul %59, %61, %cst_76 {dimension_numbers = #tpu.dot_dimension_numbers<[1], [0], [0], [1], [0, 0, 1, 1], [], []>} : vector<32x128xf32>, vector<128x128xf32>, vector<32x128xf32> -> vector<32x128xf32>
    %63 = arith.addf %57, %62 : vector<32x128xf32>
    %c0_77 = arith.constant 0 : index
    %c0_78 = arith.constant 0 : index
    %64 = vector.load %arg6[%c0_77, %c0_78] : memref<1x128xf32, #tpu.memory_space<vmem>>, vector<1x128xf32>
    %65 = vector.broadcast %64 : vector<1x128xf32> to vector<32x128xf32>
    %66 = arith.mulf %63, %65 : vector<32x128xf32>
    %c0_79 = arith.constant 0 : index
    %c0_80 = arith.constant 0 : index
    %67 = vector.load %arg7[%c0_79, %c0_80] : memref<1x128xf32, #tpu.memory_space<vmem>>, vector<1x128xf32>
    %68 = vector.broadcast %67 : vector<1x128xf32> to vector<32x128xf32>
    %69 = arith.addf %66, %68 : vector<32x128xf32>
    %70 = arith.addf %69, %40 : vector<32x128xf32>
    %cst_81 = arith.constant 0.000000e+00 : f32
    %71 = vector.broadcast %cst_81 : f32 to vector<32x128xf32>
    %72 = arith.maximumf %70, %71 : vector<32x128xf32>
    %73 = vector.shape_cast %72 : vector<32x128xf32> to vector<2x16x128xf32>
    %c0_82 = arith.constant 0 : index
    %c0_83 = arith.constant 0 : index
    %c0_84 = arith.constant 0 : index
    %74 = vector.load %arg11[%c0_82, %c0_83, %c0_84] : memref<2x16x128xf32, #tpu.memory_space<vmem>>, vector<2x16x128xf32>
    tpu.vector_store %arg11[%c0_82, %c0_83, %c0_84], %73 {strides = array<i32>} : memref<2x16x128xf32, #tpu.memory_space<vmem>>, vector<2x16x128xf32>,
    return
  }
  func.func @transform_0(%arg0: i32) -> (i32, i32, i32) {
    %c0_i32 = arith.constant 0 : i32
    %c0_i32_0 = arith.constant 0 : i32
    %c0_i32_1 = arith.constant 0 : i32
    return %arg0, %c0_i32, %c0_i32_0 : i32, i32, i32
  }
  func.func @transform_1(%arg0: i32) -> (i32, i32, i32) {
    %c0_i32 = arith.constant 0 : i32
    %c0_i32_0 = arith.constant 0 : i32
    %c0_i32_1 = arith.constant 0 : i32
    %c0_i32_2 = arith.constant 0 : i32
    return %c0_i32, %c0_i32_0, %c0_i32_1 : i32, i32, i32
  }
  func.func @transform_2(%arg0: i32) -> (i32, i32, i32) {
    %c0_i32 = arith.constant 0 : i32
    %c0_i32_0 = arith.constant 0 : i32
    %c0_i32_1 = arith.constant 0 : i32
    %c0_i32_2 = arith.constant 0 : i32
    return %c0_i32, %c0_i32_0, %c0_i32_1 : i32, i32, i32
  }
  func.func @transform_3(%arg0: i32) -> (i32, i32) {
    %c0_i32 = arith.constant 0 : i32
    %c0_i32_0 = arith.constant 0 : i32
    %c0_i32_1 = arith.constant 0 : i32
    return %c0_i32, %c0_i32_0 : i32, i32
  }
  func.func @transform_4(%arg0: i32) -> (i32, i32) {
    %c0_i32 = arith.constant 0 : i32
    %c0_i32_0 = arith.constant 0 : i32
    %c0_i32_1 = arith.constant 0 : i32
    return %c0_i32, %c0_i32_0 : i32, i32
  }
  func.func @transform_5(%arg0: i32) -> (i32, i32) {
    %c0_i32 = arith.constant 0 : i32
    %c0_i32_0 = arith.constant 0 : i32
    %c0_i32_1 = arith.constant 0 : i32
    return %c0_i32, %c0_i32_0 : i32, i32
  }
  func.func @transform_6(%arg0: i32) -> (i32, i32) {
    %c0_i32 = arith.constant 0 : i32
    %c0_i32_0 = arith.constant 0 : i32
    %c0_i32_1 = arith.constant 0 : i32
    return %c0_i32, %c0_i32_0 : i32, i32
  }
  func.func @transform_7(%arg0: i32) -> (i32, i32) {
    %c0_i32 = arith.constant 0 : i32
    %c0_i32_0 = arith.constant 0 : i32
    %c0_i32_1 = arith.constant 0 : i32
    return %c0_i32, %c0_i32_0 : i32, i32
  }
  func.func @transform_8(%arg0: i32) -> (i32, i32) {
    %c0_i32 = arith.constant 0 : i32
    %c0_i32_0 = arith.constant 0 : i32
    %c0_i32_1 = arith.constant 0 : i32
    return %c0_i32, %c0_i32_0 : i32, i32
  }
  func.func @transform_9(%arg0: i32) -> (i32, i32) {
    %c0_i32 = arith.constant 0 : i32
    %c0_i32_0 = arith.constant 0 : i32
    %c0_i32_1 = arith.constant 0 : i32
    return %c0_i32, %c0_i32_0 : i32, i32
  }
  func.func @transform_10(%arg0: i32) -> (i32, i32, i32) {
    %c0_i32 = arith.constant 0 : i32
    %c0_i32_0 = arith.constant 0 : i32
    %c0_i32_1 = arith.constant 0 : i32
    return %arg0, %c0_i32, %c0_i32_0 : i32, i32, i32
  }
}

</mosaic_0001>

<llo_original>
// kernel: fwd.1
$region0: #{fwd.1}
  #allocation0 [shape = 'u32[]', space=smem, size = 0x4, offset = 0x4, fixed_abs, tag = 'smem constant byte address 0x4 - core index']
  #allocation1 [shape = 'u32[144,128]{1,0:T(1,128)}', space=vmem, size = 0x12000, scoped, tag = 'internal scratch']
  #allocation2 [shape = 'f32[2,18,64]{2,1,0:T(8,128)}', space=vmem, size = 0x6000, scoped, tag = 'scratch operand']
  #allocation3 [shape = 'f32[2,18,128]{2,1,0:T(8,128)}', space=vmem, size = 0x6000, scoped, tag = 'scratch operand']
  %s0 = inlined_call_operand.vmem [shape: f32[2,16,64], index: 0, kind: input, shape index: {}]
  %s1 = inlined_call_operand.hbm [shape: f32[3,64,128], index: 1, kind: input, shape index: {}]
  %s2 = inlined_call_operand.vmem [shape: f32[3,128,128], index: 2, kind: input, shape index: {}]
  %s3 = inlined_call_operand.vmem [shape: f32[1,128], index: 3, kind: input, shape index: {}]
  %s4 = inlined_call_operand.vmem [shape: f32[1,128], index: 4, kind: input, shape index: {}]
  %s5 = inlined_call_operand.vmem [shape: f32[1,128], index: 5, kind: input, shape index: {}]
  %s6 = inlined_call_operand.vmem [shape: f32[1,128], index: 6, kind: input, shape index: {}]
  %s7 = inlined_call_operand.hbm [shape: f32[64,128], index: 7, kind: input, shape index: {}]
  %s8 = inlined_call_operand.vmem [shape: f32[1,128], index: 8, kind: input, shape index: {}]
  %s9 = inlined_call_operand.vmem [shape: f32[1,128], index: 9, kind: input, shape index: {}]
  %s10 = inlined_call_operand.vmem [shape: f32[2,16,128], index: 10, kind: output, shape index: {}]
  %s11 = sld [smem:[#allocation0]]
  $region58: #{fwd.1} parent=0
    _
  %s13 = ssub.s32 1, %s11
  %s14 = scalar_select 0, %s13, %s11
  $region1: #{fwd.1} parent=0
    #allocation4 [shape = 'u8[98304]{0}', space=vmem, size = 0x18000, scoped, tag = 'input window, operand 1, single buffered']
    #allocation5 [shape = 's32[1]{0}', space=sflag, size = 0x4, scoped, tag = 'scoped memory for fwd.1']
    #allocation6 [shape = 'u8[32768]{0}', space=vmem, size = 0x8000, scoped, tag = 'input window, operand 7, single buffered']
    #allocation7 [shape = 's32[1]{0}', space=sflag, size = 0x4, scoped, tag = 'scoped memory for fwd.1']
    %15 = vsyncpa [#allocation5], 0
    %16 = vsyncpa [#allocation7], 0
    // Predicated region
    $region2: #{fwd.1} parent=1 // pred_check
      _
    $region3: #{fwd.1} parent=1 // pred_check_branch
      %18 = sbr.rel (0) target = $region5
    $region4: #{fwd.1} parent=1 // pred_region
      _
    $region5: #{fwd.1} parent=1 // pred_fallthru
      _
    // Predicated region
    $region6: #{fwd.1} parent=1 // pred_check
      _
    $region7: #{fwd.1} parent=1 // pred_check_branch
      %20 = sbr.rel (0) target = $region9
    $region8: #{fwd.1} parent=1 // pred_region
      %s22 = ssub.s32 3072, 3072
      %23 = vsyncadd [#allocation5], %s22
      %s24 = sshll.u32 [#allocation4], 4
      %s25 = int_to_ptr.vmem [resolvable:$true] %s24
      %30 = dma.hbm_to_vmem [thread:$0]  %s1, 3072, %s25, [#allocation5], 128, 128, 8
    $region9: #{fwd.1} parent=1 // pred_fallthru
      _
    // Predicated region
    $region10: #{fwd.1} parent=1 // pred_check
      _
    $region11: #{fwd.1} parent=1 // pred_check_branch
      %32 = sbr.rel (0) target = $region13
    $region12: #{fwd.1} parent=1 // pred_region
      _
    $region13: #{fwd.1} parent=1 // pred_fallthru
      _
    // Predicated region
    $region14: #{fwd.1} parent=1 // pred_check
      _
    $region15: #{fwd.1} parent=1 // pred_check_branch
      %34 = sbr.rel (0) target = $region17
    $region16: #{fwd.1} parent=1 // pred_region
      _
    $region17: #{fwd.1} parent=1 // pred_fallthru
      _
    // Predicated region
    $region18: #{fwd.1} parent=1 // pred_check
      _
    $region19: #{fwd.1} parent=1 // pred_check_branch
      %36 = sbr.rel (0) target = $region21
    $region20: #{fwd.1} parent=1 // pred_region
      _
    $region21: #{fwd.1} parent=1 // pred_fallthru
      _
    // Predicated region
    $region22: #{fwd.1} parent=1 // pred_check
      _
    $region23: #{fwd.1} parent=1 // pred_check_branch
      %38 = sbr.rel (0) target = $region25
    $region24: #{fwd.1} parent=1 // pred_region
      _
    $region25: #{fwd.1} parent=1 // pred_fallthru
      _
    // Predicated region
    $region26: #{fwd.1} parent=1 // pred_check
      _
    $region27: #{fwd.1} parent=1 // pred_check_branch
      %40 = sbr.rel (0) target = $region29
    $region28: #{fwd.1} parent=1 // pred_region
      _
    $region29: #{fwd.1} parent=1 // pred_fallthru
      _
    // Predicated region
    $region30: #{fwd.1} parent=1 // pred_check
      _
    $region31: #{fwd.1} parent=1 // pred_check_branch
      %42 = sbr.rel (0) target = $region33
    $region32: #{fwd.1} parent=1 // pred_region
      %s44 = ssub.s32 1024, 1024
      %45 = vsyncadd [#allocation7], %s44
      %s46 = sshll.u32 [#allocation6], 4
      %s47 = int_to_ptr.vmem [resolvable:$true] %s46
      %52 = dma.hbm_to_vmem [thread:$0]  %s7, 1024, %s47, [#allocation7], 128, 128, 8
    $region33: #{fwd.1} parent=1 // pred_fallthru
      _
    // Predicated region
    $region34: #{fwd.1} parent=1 // pred_check
      _
    $region35: #{fwd.1} parent=1 // pred_check_branch
      %54 = sbr.rel (0) target = $region37
    $region36: #{fwd.1} parent=1 // pred_region
      _
    $region37: #{fwd.1} parent=1 // pred_fallthru
      _
    // Predicated region
    $region38: #{fwd.1} parent=1 // pred_check
      _
    $region39: #{fwd.1} parent=1 // pred_check_branch
      %56 = sbr.rel (0) target = $region41
    $region40: #{fwd.1} parent=1 // pred_region
      _
    $region41: #{fwd.1} parent=1 // pred_fallthru
      _
    // Predicated region
    $region42: #{fwd.1} parent=1 // pred_check
      _
    $region43: #{fwd.1} parent=1 // pred_check_branch
      %58 = sbr.rel (0) target = $region45
    $region44: #{fwd.1} parent=1 // pred_region
      %59 = dma.done [#allocation5], 3072
    $region45: #{fwd.1} parent=1 // pred_fallthru
      _
    // Predicated region
    $region46: #{fwd.1} parent=1 // pred_check
      _
    $region47: #{fwd.1} parent=1 // pred_check_branch
      %61 = sbr.rel (0) target = $region49
    $region48: #{fwd.1} parent=1 // pred_region
      %62 = dma.done [#allocation7], 1024
    $region49: #{fwd.1} parent=1 // pred_fallthru
      _
    %vm63 = vcmask 516096
    %64 = vst.msk [vmem:[#allocation2] sm:$0x1] %vm63, 0.0
    %65 = vst.msk [vmem:[#allocation2 + $0x18] sm:$0x1] %vm63, 0.0
    %66 = vst.msk [vmem:[#allocation2 + $0x11] sm:$0x1] %vm63, 0.0
    %67 = vst.msk [vmem:[#allocation2 + $0x29] sm:$0x1] %vm63, 0.0
    %v68 = vld [vmem:[%s0] sm:$0xff]
    %v69 = vld [vmem:[%s0 + $0x8] sm:$0xff]
    %v70 = vld [vmem:[%s0 + $0x10] sm:$0xff]
    %v71 = vld [vmem:[%s0 + $0x18] sm:$0xff]
    %vm72 = vcmask 523264
    %73 = vst.msk [vmem:[#allocation2 + $0x1] sm:$0xff] %vm72, %v68
    %74 = vst.msk [vmem:[#allocation2 + $0x9] sm:$0xff] %vm72, %v69
    %75 = vst.msk [vmem:[#allocation2 + $0x19] sm:$0xff] %vm72, %v70
    %76 = vst.msk [vmem:[#allocation2 + $0x21] sm:$0xff] %vm72, %v71
    %v77 = vld [vmem:[#allocation2] sm:$0xff]
    %v78 = vld [vmem:[#allocation2 + $0x8] sm:$0xff]
    %v79 = vld [vmem:[#allocation2 + $0x18] sm:$0xff]
    %v80 = vld [vmem:[#allocation2 + $0x20] sm:$0xff]
    %v81 = vld [vmem:[#allocation4] sm:$0xff]
    %v82 = vld [vmem:[#allocation4 + $0x8] sm:$0xff]
    %v83 = vld [vmem:[#allocation4 + $0x10] sm:$0xff]
    %v84 = vld [vmem:[#allocation4 + $0x18] sm:$0xff]
    %v85 = vld [vmem:[#allocation4 + $0x20] sm:$0xff]
    %v86 = vld [vmem:[#allocation4 + $0x28] sm:$0xff]
    %v87 = vld [vmem:[#allocation4 + $0x30] sm:$0xff]
    %v88 = vld [vmem:[#allocation4 + $0x38] sm:$0xff]
    %v89 = vld [vmem:[#allocation2 + $0x1] sm:$0xff]
    %v90 = vld [vmem:[#allocation2 + $0x9] sm:$0xff]
    %v91 = vld [vmem:[#allocation2 + $0x19] sm:$0xff]
    %v92 = vld [vmem:[#allocation2 + $0x21] sm:$0xff]
    %s93 = scalar_lea.vmem [#allocation4], 64
    %v94 = vld [vmem:[%s93] sm:$0xff]
    %v95 = vld [vmem:[%s93 + $0x8] sm:$0xff]
    %v96 = vld [vmem:[%s93 + $0x10] sm:$0xff]
    %v97 = vld [vmem:[%s93 + $0x18] sm:$0xff]
    %v98 = vld [vmem:[%s93 + $0x20] sm:$0xff]
    %v99 = vld [vmem:[%s93 + $0x28] sm:$0xff]
    %v100 = vld [vmem:[%s93 + $0x30] sm:$0xff]
    %v101 = vld [vmem:[%s93 + $0x38] sm:$0xff]
    %v103 = vsel %vm72, %v89, 0
    %v106 = vsel %vm72, %v90, 0
    %v109 = vsel %vm72, %v91, 0
    %v112 = vsel %vm72, %v92, 0
    %114 = vmatprep.subr.mxu0 0.0
    %115 = vmatpush1.msra.mxu0 0.0
    %116 = vmatprep.subr.mxu0 0.0
    %117 = vmatpush1.msra.mxu0 0.0
    %118 = vmatprep.subr.mxu0 0.0
    %119 = vmatpush1.msra.mxu0 0.0
    %120 = vmatprep.subr.mxu0 0.0
    %121 = vmatpush1.msra.mxu0 0.0
    %122 = vmatprep.subr.mxu0 0.0
    %123 = vmatpush1.msra.mxu0 0.0
    %124 = vmatprep.subr.mxu0 0.0
    %125 = vmatpush1.msra.mxu0 0.0
    %126 = vmatprep.subr.mxu0 0.0
    %127 = vmatpush1.msra.mxu0 0.0
    %128 = vmatprep.subr.mxu0 0.0
    %129 = vmatpush1.msra.mxu0 0.0
    %130 = vmatprep.subr.mxu0 0.0
    %131 = vmatpush1.msra.mxu0 %v101
    %132 = vmatprep.subr.mxu0 0.0
    %133 = vmatpush1.msra.mxu0 %v100
    %134 = vmatprep.subr.mxu0 0.0
    %135 = vmatpush1.msra.mxu0 %v99
    %136 = vmatprep.subr.mxu0 0.0
    %137 = vmatpush1.msra.mxu0 %v98
    %138 = vmatprep.subr.mxu0 0.0
    %139 = vmatpush1.msra.mxu0 %v97
    %140 = vmatprep.subr.mxu0 0.0
    %141 = vmatpush1.msra.mxu0 %v96
    %142 = vmatprep.subr.mxu0 0.0
    %143 = vmatpush1.msra.mxu0 %v95
    %144 = vmatprep.subr.mxu0 0.0
    %145 = vmatpush1.msra.mxu0 %v94
    %146 = vmatprep.subr.mxu0 0.0
    %147 = vmatpush2.msra.mxu0 0.0
    %148 = vmatprep.subr.mxu0 0.0
    %149 = vmatpush2.msra.mxu0 0.0
    %150 = vmatprep.subr.mxu0 0.0
    %151 = vmatpush2.msra.mxu0 0.0
    %152 = vmatprep.subr.mxu0 0.0
    %153 = vmatpush2.msra.mxu0 0.0
    %154 = vmatprep.subr.mxu0 0.0
    %155 = vmatpush2.msra.mxu0 0.0
    %156 = vmatprep.subr.mxu0 0.0
    %157 = vmatpush2.msra.mxu0 0.0
    %158 = vmatprep.subr.mxu0 0.0
    %159 = vmatpush2.msra.mxu0 0.0
    %160 = vmatprep.subr.mxu0 0.0
    %161 = vmatpush2.msra.mxu0 0.0
    %162 = vmatprep.subr.mxu0 0.0
    %163 = vmatpush2.msra.mxu0 0.0
    %164 = vmatprep.subr.mxu0 0.0
    %165 = vmatpush2.msra.mxu0 0.0
    %166 = vmatprep.subr.mxu0 0.0
    %167 = vmatpush2.msra.mxu0 0.0
    %168 = vmatprep.subr.mxu0 0.0
    %169 = vmatpush2.msra.mxu0 0.0
    %170 = vmatprep.subr.mxu0 0.0
    %171 = vmatpush2.msra.mxu0 0.0
    %172 = vmatprep.subr.mxu0 0.0
    %173 = vmatpush2.msra.mxu0 0.0
    %174 = vmatprep.subr.mxu0 0.0
    %175 = vmatpush2.msra.mxu0 0.0
    %176 = vmatprep.subr.mxu0 0.0
    %177 = vmatpush2.msra.mxu0 0.0
    %178 = vmatprep.mubr.f32.mxu0 0.0
    %179 = vmatmul.mubr.f32.gmra.mxu0 %v103
    %v180 = vpop.f32.mrf.mxu0
    %v181 = vadd.f32 0.0, %v180
    %v182 = vpop.f32.mrf.mxu0
    %183 = vmatprep.mubr.f32.mxu0 0.0
    %184 = vmatmul.mubr.f32.gmra.mxu0 %v106
    %v185 = vpop.f32.mrf.mxu0
    %v186 = vadd.f32 0.0, %v185
    %v187 = vpop.f32.mrf.mxu0
    %188 = vmatprep.mubr.f32.mxu0 0.0
    %189 = vmatmul.mubr.f32.gmra.mxu0 %v109
    %v190 = vpop.f32.mrf.mxu0
    %v191 = vadd.f32 0.0, %v190
    %v192 = vpop.f32.mrf.mxu0
    %193 = vmatprep.mubr.f32.mxu0 0.0
    %194 = vmatmul.mubr.f32.gmra.mxu0 %v112
    %v195 = vpop.f32.mrf.mxu0
    %v196 = vadd.f32 0.0, %v195
    %v197 = vpop.f32.mrf.mxu0
    %198 = vdwg.mxu0
    %v200 = vsel %vm72, %v77, 0
    %v203 = vsel %vm72, %v78, 0
    %v206 = vsel %vm72, %v79, 0
    %v209 = vsel %vm72, %v80, 0
    %211 = vmatprep.subr.mxu0 0.0
    %212 = vmatpush1.msra.mxu0 0.0
    %213 = vmatprep.subr.mxu0 0.0
    %214 = vmatpush1.msra.mxu0 0.0
    %215 = vmatprep.subr.mxu0 0.0
    %216 = vmatpush1.msra.mxu0 0.0
    %217 = vmatprep.subr.mxu0 0.0
    %218 = vmatpush1.msra.mxu0 0.0
    %219 = vmatprep.subr.mxu0 0.0
    %220 = vmatpush1.msra.mxu0 0.0
    %221 = vmatprep.subr.mxu0 0.0
    %222 = vmatpush1.msra.mxu0 0.0
    %223 = vmatprep.subr.mxu0 0.0
    %224 = vmatpush1.msra.mxu0 0.0
    %225 = vmatprep.subr.mxu0 0.0
    %226 = vmatpush1.msra.mxu0 0.0
    %227 = vmatprep.subr.mxu0 0.0
    %228 = vmatpush1.msra.mxu0 %v88
    %229 = vmatprep.subr.mxu0 0.0
    %230 = vmatpush1.msra.mxu0 %v87
    %231 = vmatprep.subr.mxu0 0.0
    %232 = vmatpush1.msra.mxu0 %v86
    %233 = vmatprep.subr.mxu0 0.0
    %234 = vmatpush1.msra.mxu0 %v85
    %235 = vmatprep.subr.mxu0 0.0
    %236 = vmatpush1.msra.mxu0 %v84
    %237 = vmatprep.subr.mxu0 0.0
    %238 = vmatpush1.msra.mxu0 %v83
    %239 = vmatprep.subr.mxu0 0.0
    %240 = vmatpush1.msra.mxu0 %v82
    %241 = vmatprep.subr.mxu0 0.0
    %242 = vmatpush1.msra.mxu0 %v81
    %243 = vmatprep.subr.mxu0 0.0
    %244 = vmatpush2.msra.mxu0 0.0
    %245 = vmatprep.subr.mxu0 0.0
    %246 = vmatpush2.msra.mxu0 0.0
    %247 = vmatprep.subr.mxu0 0.0
    %248 = vmatpush2.msra.mxu0 0.0
    %249 = vmatprep.subr.mxu0 0.0
    %250 = vmatpush2.msra.mxu0 0.0
    %251 = vmatprep.subr.mxu0 0.0
    %252 = vmatpush2.msra.mxu0 0.0
    %253 = vmatprep.subr.mxu0 0.0
    %254 = vmatpush2.msra.mxu0 0.0
    %255 = vmatprep.subr.mxu0 0.0
    %256 = vmatpush2.msra.mxu0 0.0
    %257 = vmatprep.subr.mxu0 0.0
    %258 = vmatpush2.msra.mxu0 0.0
    %259 = vmatprep.subr.mxu0 0.0
    %260 = vmatpush2.msra.mxu0 0.0
    %261 = vmatprep.subr.mxu0 0.0
    %262 = vmatpush2.msra.mxu0 0.0
    %263 = vmatprep.subr.mxu0 0.0
    %264 = vmatpush2.msra.mxu0 0.0
    %265 = vmatprep.subr.mxu0 0.0
    %266 = vmatpush2.msra.mxu0 0.0
    %267 = vmatprep.subr.mxu0 0.0
    %268 = vmatpush2.msra.mxu0 0.0
    %269 = vmatprep.subr.mxu0 0.0
    %270 = vmatpush2.msra.mxu0 0.0
    %271 = vmatprep.subr.mxu0 0.0
    %272 = vmatpush2.msra.mxu0 0.0
    %273 = vmatprep.subr.mxu0 0.0
    %274 = vmatpush2.msra.mxu0 0.0
    %275 = vmatprep.mubr.f32.mxu0 0.0
    %276 = vmatmul.mubr.f32.gmra.mxu0 %v200
    %v277 = vpop.f32.mrf.mxu0
    %v278 = vadd.f32 %v181, %v277
    %v279 = vpop.f32.mrf.mxu0
    %280 = vmatprep.mubr.f32.mxu0 0.0
    %281 = vmatmul.mubr.f32.gmra.mxu0 %v203
    %v282 = vpop.f32.mrf.mxu0
    %v283 = vadd.f32 %v186, %v282
    %v284 = vpop.f32.mrf.mxu0
    %285 = vmatprep.mubr.f32.mxu0 0.0
    %286 = vmatmul.mubr.f32.gmra.mxu0 %v206
    %v287 = vpop.f32.mrf.mxu0
    %v288 = vadd.f32 %v191, %v287
    %v289 = vpop.f32.mrf.mxu0
    %290 = vmatprep.mubr.f32.mxu0 0.0
    %291 = vmatmul.mubr.f32.gmra.mxu0 %v209
    %v292 = vpop.f32.mrf.mxu0
    %v293 = vadd.f32 %v196, %v292
    %v294 = vpop.f32.mrf.mxu0
    %295 = vdwg.mxu0
    %v296 = vld [vmem:[#allocation2 + $0x2] sm:$0xff]
    %v297 = vld [vmem:[#allocation2 + $0xa] sm:$0xff]
    %v298 = vld [vmem:[#allocation2 + $0x1a] sm:$0xff]
    %v299 = vld [vmem:[#allocation2 + $0x22] sm:$0xff]
    %s300 = scalar_lea.vmem [#allocation4], 128
    %v301 = vld [vmem:[%s300] sm:$0xff]
    %v302 = vld [vmem:[%s300 + $0x8] sm:$0xff]
    %v303 = vld [vmem:[%s300 + $0x10] sm:$0xff]
    %v304 = vld [vmem:[%s300 + $0x18] sm:$0xff]
    %v305 = vld [vmem:[%s300 + $0x20] sm:$0xff]
    %v306 = vld [vmem:[%s300 + $0x28] sm:$0xff]
    %v307 = vld [vmem:[%s300 + $0x30] sm:$0xff]
    %v308 = vld [vmem:[%s300 + $0x38] sm:$0xff]
    %v310 = vsel %vm72, %v296, 0
    %v313 = vsel %vm72, %v297, 0
    %v316 = vsel %vm72, %v298, 0
    %v319 = vsel %vm72, %v299, 0
    %321 = vmatprep.subr.mxu0 0.0
    %322 = vmatpush1.msra.mxu0 0.0
    %323 = vmatprep.subr.mxu0 0.0
    %324 = vmatpush1.msra.mxu0 0.0
    %325 = vmatprep.subr.mxu0 0.0
    %326 = vmatpush1.msra.mxu0 0.0
    %327 = vmatprep.subr.mxu0 0.0
    %328 = vmatpush1.msra.mxu0 0.0
    %329 = vmatprep.subr.mxu0 0.0
    %330 = vmatpush1.msra.mxu0 0.0
    %331 = vmatprep.subr.mxu0 0.0
    %332 = vmatpush1.msra.mxu0 0.0
    %333 = vmatprep.subr.mxu0 0.0
    %334 = vmatpush1.msra.mxu0 0.0
    %335 = vmatprep.subr.mxu0 0.0
    %336 = vmatpush1.msra.mxu0 0.0
    %337 = vmatprep.subr.mxu0 0.0
    %338 = vmatpush1.msra.mxu0 %v308
    %339 = vmatprep.subr.mxu0 0.0
    %340 = vmatpush1.msra.mxu0 %v307
    %341 = vmatprep.subr.mxu0 0.0
    %342 = vmatpush1.msra.mxu0 %v306
    %343 = vmatprep.subr.mxu0 0.0
    %344 = vmatpush1.msra.mxu0 %v305
    %345 = vmatprep.subr.mxu0 0.0
    %346 = vmatpush1.msra.mxu0 %v304
    %347 = vmatprep.subr.mxu0 0.0
    %348 = vmatpush1.msra.mxu0 %v303
    %349 = vmatprep.subr.mxu0 0.0
    %350 = vmatpush1.msra.mxu0 %v302
    %351 = vmatprep.subr.mxu0 0.0
    %352 = vmatpush1.msra.mxu0 %v301
    %353 = vmatprep.subr.mxu0 0.0
    %354 = vmatpush2.msra.mxu0 0.0
    %355 = vmatprep.subr.mxu0 0.0
    %356 = vmatpush2.msra.mxu0 0.0
    %357 = vmatprep.subr.mxu0 0.0
    %358 = vmatpush2.msra.mxu0 0.0
    %359 = vmatprep.subr.mxu0 0.0
    %360 = vmatpush2.msra.mxu0 0.0
    %361 = vmatprep.subr.mxu0 0.0
    %362 = vmatpush2.msra.mxu0 0.0
    %363 = vmatprep.subr.mxu0 0.0
    %364 = vmatpush2.msra.mxu0 0.0
    %365 = vmatprep.subr.mxu0 0.0
    %366 = vmatpush2.msra.mxu0 0.0
    %367 = vmatprep.subr.mxu0 0.0
    %368 = vmatpush2.msra.mxu0 0.0
    %369 = vmatprep.subr.mxu0 0.0
    %370 = vmatpush2.msra.mxu0 0.0
    %371 = vmatprep.subr.mxu0 0.0
    %372 = vmatpush2.msra.mxu0 0.0
    %373 = vmatprep.subr.mxu0 0.0
    %374 = vmatpush2.msra.mxu0 0.0
    %375 = vmatprep.subr.mxu0 0.0
    %376 = vmatpush2.msra.mxu0 0.0
    %377 = vmatprep.subr.mxu0 0.0
    %378 = vmatpush2.msra.mxu0 0.0
    %379 = vmatprep.subr.mxu0 0.0
    %380 = vmatpush2.msra.mxu0 0.0
    %381 = vmatprep.subr.mxu0 0.0
    %382 = vmatpush2.msra.mxu0 0.0
    %383 = vmatprep.subr.mxu0 0.0
    %384 = vmatpush2.msra.mxu0 0.0
    %385 = vmatprep.mubr.f32.mxu0 0.0
    %386 = vmatmul.mubr.f32.gmra.mxu0 %v310
    %v387 = vpop.f32.mrf.mxu0
    %v388 = vadd.f32 0.0, %v387
    %v389 = vpop.f32.mrf.mxu0
    %390 = vmatprep.mubr.f32.mxu0 0.0
    %391 = vmatmul.mubr.f32.gmra.mxu0 %v313
    %v392 = vpop.f32.mrf.mxu0
    %v393 = vadd.f32 0.0, %v392
    %v394 = vpop.f32.mrf.mxu0
    %395 = vmatprep.mubr.f32.mxu0 0.0
    %396 = vmatmul.mubr.f32.gmra.mxu0 %v316
    %v397 = vpop.f32.mrf.mxu0
    %v398 = vadd.f32 0.0, %v397
    %v399 = vpop.f32.mrf.mxu0
    %400 = vmatprep.mubr.f32.mxu0 0.0
    %401 = vmatmul.mubr.f32.gmra.mxu0 %v319
    %v402 = vpop.f32.mrf.mxu0
    %v403 = vadd.f32 0.0, %v402
    %v404 = vpop.f32.mrf.mxu0
    %405 = vdwg.mxu0
    %v406 = vadd.f32 %v278, %v388
    %v407 = vadd.f32 %v283, %v393
    %v408 = vadd.f32 %v288, %v398
    %v409 = vadd.f32 %v293, %v403
    %v410 = vld [vmem:[%s3] sm:$0x1]
    %v412 = vlaneseq
    %v413 = vshrl.u32 %v412, 7
    %v414 = vsub.s32 0, %v413
    %v415 = vrot.slane %v410, %v414
    %v417 = vmul.f32 %v406, %v415
    %v418 = vmul.f32 %v407, %v415
    %v419 = vmul.f32 %v408, %v415
    %v420 = vmul.f32 %v409, %v415
    %v421 = vld [vmem:[%s4] sm:$0x1]
    %v423 = vlaneseq
    %v424 = vshrl.u32 %v423, 7
    %v425 = vsub.s32 0, %v424
    %v426 = vrot.slane %v421, %v425
    %v428 = vadd.f32 %v417, %v426
    %v429 = vadd.f32 %v418, %v426
    %v430 = vadd.f32 %v419, %v426
    %v431 = vadd.f32 %v420, %v426
    %v432 = vmax.f32 %v428, 0.0
    %v433 = vmax.f32 %v429, 0.0
    %v434 = vmax.f32 %v430, 0.0
    %v435 = vmax.f32 %v431, 0.0
    %v436 = vld [vmem:[#allocation6] sm:$0xff]
    %v437 = vld [vmem:[#allocation6 + $0x8] sm:$0xff]
    %v438 = vld [vmem:[#allocation6 + $0x10] sm:$0xff]
    %v439 = vld [vmem:[#allocation6 + $0x18] sm:$0xff]
    %v440 = vld [vmem:[#allocation6 + $0x20] sm:$0xff]
    %v441 = vld [vmem:[#allocation6 + $0x28] sm:$0xff]
    %v442 = vld [vmem:[#allocation6 + $0x30] sm:$0xff]
    %v443 = vld [vmem:[#allocation6 + $0x38] sm:$0xff]
    %444 = vmatprep.subr.mxu0 0.0
    %445 = vmatpush1.msra.mxu0 0.0
    %446 = vmatprep.subr.mxu0 0.0
    %447 = vmatpush1.msra.mxu0 0.0
    %448 = vmatprep.subr.mxu0 0.0
    %449 = vmatpush1.msra.mxu0 0.0
    %450 = vmatprep.subr.mxu0 0.0
    %451 = vmatpush1.msra.mxu0 0.0
    %452 = vmatprep.subr.mxu0 0.0
    %453 = vmatpush1.msra.mxu0 0.0
    %454 = vmatprep.subr.mxu0 0.0
    %455 = vmatpush1.msra.mxu0 0.0
    %456 = vmatprep.subr.mxu0 0.0
    %457 = vmatpush1.msra.mxu0 0.0
    %458 = vmatprep.subr.mxu0 0.0
    %459 = vmatpush1.msra.mxu0 0.0
    %460 = vmatprep.subr.mxu0 0.0
    %461 = vmatpush1.msra.mxu0 %v443
    %462 = vmatprep.subr.mxu0 0.0
    %463 = vmatpush1.msra.mxu0 %v442
    %464 = vmatprep.subr.mxu0 0.0
    %465 = vmatpush1.msra.mxu0 %v441
    %466 = vmatprep.subr.mxu0 0.0
    %467 = vmatpush1.msra.mxu0 %v440
    %468 = vmatprep.subr.mxu0 0.0
    %469 = vmatpush1.msra.mxu0 %v439
    %470 = vmatprep.subr.mxu0 0.0
    %471 = vmatpush1.msra.mxu0 %v438
    %472 = vmatprep.subr.mxu0 0.0
    %473 = vmatpush1.msra.mxu0 %v437
    %474 = vmatprep.subr.mxu0 0.0
    %475 = vmatpush1.msra.mxu0 %v436
    %476 = vmatprep.subr.mxu0 0.0
    %477 = vmatpush2.msra.mxu0 0.0
    %478 = vmatprep.subr.mxu0 0.0
    %479 = vmatpush2.msra.mxu0 0.0
    %480 = vmatprep.subr.mxu0 0.0
    %481 = vmatpush2.msra.mxu0 0.0
    %482 = vmatprep.subr.mxu0 0.0
    %483 = vmatpush2.msra.mxu0 0.0
    %484 = vmatprep.subr.mxu0 0.0
    %485 = vmatpush2.msra.mxu0 0.0
    %486 = vmatprep.subr.mxu0 0.0
    %487 = vmatpush2.msra.mxu0 0.0
    %488 = vmatprep.subr.mxu0 0.0
    %489 = vmatpush2.msra.mxu0 0.0
    %490 = vmatprep.subr.mxu0 0.0
    %491 = vmatpush2.msra.mxu0 0.0
    %492 = vmatprep.subr.mxu0 0.0
    %493 = vmatpush2.msra.mxu0 0.0
    %494 = vmatprep.subr.mxu0 0.0
    %495 = vmatpush2.msra.mxu0 0.0
    %496 = vmatprep.subr.mxu0 0.0
    %497 = vmatpush2.msra.mxu0 0.0
    %498 = vmatprep.subr.mxu0 0.0
    %499 = vmatpush2.msra.mxu0 0.0
    %500 = vmatprep.subr.mxu0 0.0
    %501 = vmatpush2.msra.mxu0 0.0
    %502 = vmatprep.subr.mxu0 0.0
    %503 = vmatpush2.msra.mxu0 0.0
    %504 = vmatprep.subr.mxu0 0.0
    %505 = vmatpush2.msra.mxu0 0.0
    %506 = vmatprep.subr.mxu0 0.0
    %507 = vmatpush2.msra.mxu0 0.0
    %508 = vmatprep.mubr.f32.mxu0 0.0
    %509 = vmatmul.mubr.f32.gmra.mxu0 %v103
    %v510 = vpop.f32.mrf.mxu0
    %v511 = vadd.f32 0.0, %v510
    %v512 = vpop.f32.mrf.mxu0
    %513 = vmatprep.mubr.f32.mxu0 0.0
    %514 = vmatmul.mubr.f32.gmra.mxu0 %v106
    %v515 = vpop.f32.mrf.mxu0
    %v516 = vadd.f32 0.0, %v515
    %v517 = vpop.f32.mrf.mxu0
    %518 = vmatprep.mubr.f32.mxu0 0.0
    %519 = vmatmul.mubr.f32.gmra.mxu0 %v109
    %v520 = vpop.f32.mrf.mxu0
    %v521 = vadd.f32 0.0, %v520
    %v522 = vpop.f32.mrf.mxu0
    %523 = vmatprep.mubr.f32.mxu0 0.0
    %524 = vmatmul.mubr.f32.gmra.mxu0 %v112
    %v525 = vpop.f32.mrf.mxu0
    %v526 = vadd.f32 0.0, %v525
    %v527 = vpop.f32.mrf.mxu0
    %528 = vdwg.mxu0
    %v529 = vld [vmem:[%s8] sm:$0x1]
    %v531 = vlaneseq
    %v532 = vshrl.u32 %v531, 7
    %v533 = vsub.s32 0, %v532
    %v534 = vrot.slane %v529, %v533
    %v536 = vmul.f32 %v511, %v534
    %v537 = vmul.f32 %v516, %v534
    %v538 = vmul.f32 %v521, %v534
    %v539 = vmul.f32 %v526, %v534
    %v540 = vld [vmem:[%s9] sm:$0x1]
    %v542 = vlaneseq
    %v543 = vshrl.u32 %v542, 7
    %v544 = vsub.s32 0, %v543
    %v545 = vrot.slane %v540, %v544
    %v547 = vadd.f32 %v536, %v545
    %v548 = vadd.f32 %v537, %v545
    %v549 = vadd.f32 %v538, %v545
    %v550 = vadd.f32 %v539, %v545
    %551 = vst [vmem:[#allocation3] sm:$0x1] 0.0
    %552 = vst [vmem:[#allocation3 + $0x18] sm:$0x1] 0.0
    %553 = vst [vmem:[#allocation3 + $0x11] sm:$0x1] 0.0
    %554 = vst [vmem:[#allocation3 + $0x29] sm:$0x1] 0.0
    %555 = vst [vmem:[#allocation3 + $0x1] sm:$0xff] %v432
    %556 = vst [vmem:[#allocation3 + $0x9] sm:$0xff] %v433
    %557 = vst [vmem:[#allocation3 + $0x19] sm:$0xff] %v434
    %558 = vst [vmem:[#allocation3 + $0x21] sm:$0xff] %v435
    %v559 = vld [vmem:[#allocation3] sm:$0xff]
    %v560 = vld [vmem:[#allocation3 + $0x8] sm:$0xff]
    %v561 = vld [vmem:[#allocation3 + $0x18] sm:$0xff]
    %v562 = vld [vmem:[#allocation3 + $0x20] sm:$0xff]
    %v563 = vld [vmem:[%s2] sm:$0xff]
    %v564 = vld [vmem:[%s2 + $0x8] sm:$0xff]
    %v565 = vld [vmem:[%s2 + $0x10] sm:$0xff]
    %v566 = vld [vmem:[%s2 + $0x18] sm:$0xff]
    %v567 = vld [vmem:[%s2 + $0x20] sm:$0xff]
    %v568 = vld [vmem:[%s2 + $0x28] sm:$0xff]
    %v569 = vld [vmem:[%s2 + $0x30] sm:$0xff]
    %v570 = vld [vmem:[%s2 + $0x38] sm:$0xff]
    %v571 = vld [vmem:[%s2 + $0x40] sm:$0xff]
    %v572 = vld [vmem:[%s2 + $0x48] sm:$0xff]
    %v573 = vld [vmem:[%s2 + $0x50] sm:$0xff]
    %v574 = vld [vmem:[%s2 + $0x58] sm:$0xff]
    %v575 = vld [vmem:[%s2 + $0x60] sm:$0xff]
    %v576 = vld [vmem:[%s2 + $0x68] sm:$0xff]
    %v577 = vld [vmem:[%s2 + $0x70] sm:$0xff]
    %v578 = vld [vmem:[%s2 + $0x78] sm:$0xff]
    %v579 = vld [vmem:[#allocation3 + $0x1] sm:$0xff]
    %v580 = vld [vmem:[#allocation3 + $0x9] sm:$0xff]
    %v581 = vld [vmem:[#allocation3 + $0x19] sm:$0xff]
    %v582 = vld [vmem:[#allocation3 + $0x21] sm:$0xff]
    %s583 = scalar_lea.vmem %s2, 128
    %v584 = vld [vmem:[%s583] sm:$0xff]
    %v585 = vld [vmem:[%s583 + $0x8] sm:$0xff]
    %v586 = vld [vmem:[%s583 + $0x10] sm:$0xff]
    %v587 = vld [vmem:[%s583 + $0x18] sm:$0xff]
    %v588 = vld [vmem:[%s583 + $0x20] sm:$0xff]
    %v589 = vld [vmem:[%s583 + $0x28] sm:$0xff]
    %v590 = vld [vmem:[%s583 + $0x30] sm:$0xff]
    %v591 = vld [vmem:[%s583 + $0x38] sm:$0xff]
    %v592 = vld [vmem:[%s583 + $0x40] sm:$0xff]
    %v593 = vld [vmem:[%s583 + $0x48] sm:$0xff]
    %v594 = vld [vmem:[%s583 + $0x50] sm:$0xff]
    %v595 = vld [vmem:[%s583 + $0x58] sm:$0xff]
    %v596 = vld [vmem:[%s583 + $0x60] sm:$0xff]
    %v597 = vld [vmem:[%s583 + $0x68] sm:$0xff]
    %v598 = vld [vmem:[%s583 + $0x70] sm:$0xff]
    %v599 = vld [vmem:[%s583 + $0x78] sm:$0xff]
    %600 = vmatprep.subr.mxu0 0.0
    %601 = vmatpush1.msra.mxu0 %v599
    %602 = vmatprep.subr.mxu0 0.0
    %603 = vmatpush1.msra.mxu0 %v598
    %604 = vmatprep.subr.mxu0 0.0
    %605 = vmatpush1.msra.mxu0 %v597
    %606 = vmatprep.subr.mxu0 0.0
    %607 = vmatpush1.msra.mxu0 %v596
    %608 = vmatprep.subr.mxu0 0.0
    %609 = vmatpush1.msra.mxu0 %v595
    %610 = vmatprep.subr.mxu0 0.0
    %611 = vmatpush1.msra.mxu0 %v594
    %612 = vmatprep.subr.mxu0 0.0
    %613 = vmatpush1.msra.mxu0 %v593
    %614 = vmatprep.subr.mxu0 0.0
    %615 = vmatpush1.msra.mxu0 %v592
    %616 = vmatprep.subr.mxu0 0.0
    %617 = vmatpush1.msra.mxu0 %v591
    %618 = vmatprep.subr.mxu0 0.0
    %619 = vmatpush1.msra.mxu0 %v590
    %620 = vmatprep.subr.mxu0 0.0
    %621 = vmatpush1.msra.mxu0 %v589
    %622 = vmatprep.subr.mxu0 0.0
    %623 = vmatpush1.msra.mxu0 %v588
    %624 = vmatprep.subr.mxu0 0.0
    %625 = vmatpush1.msra.mxu0 %v587
    %626 = vmatprep.subr.mxu0 0.0
    %627 = vmatpush1.msra.mxu0 %v586
    %628 = vmatprep.subr.mxu0 0.0
    %629 = vmatpush1.msra.mxu0 %v585
    %630 = vmatprep.subr.mxu0 0.0
    %631 = vmatpush1.msra.mxu0 %v584
    %632 = vmatprep.subr.mxu0 0.0
    %633 = vmatpush2.msra.mxu0 0.0
    %634 = vmatprep.subr.mxu0 0.0
    %635 = vmatpush2.msra.mxu0 0.0
    %636 = vmatprep.subr.mxu0 0.0
    %637 = vmatpush2.msra.mxu0 0.0
    %638 = vmatprep.subr.mxu0 0.0
    %639 = vmatpush2.msra.mxu0 0.0
    %640 = vmatprep.subr.mxu0 0.0
    %641 = vmatpush2.msra.mxu0 0.0
    %642 = vmatprep.subr.mxu0 0.0
    %643 = vmatpush2.msra.mxu0 0.0
    %644 = vmatprep.subr.mxu0 0.0
    %645 = vmatpush2.msra.mxu0 0.0
    %646 = vmatprep.subr.mxu0 0.0
    %647 = vmatpush2.msra.mxu0 0.0
    %648 = vmatprep.subr.mxu0 0.0
    %649 = vmatpush2.msra.mxu0 0.0
    %650 = vmatprep.subr.mxu0 0.0
    %651 = vmatpush2.msra.mxu0 0.0
    %652 = vmatprep.subr.mxu0 0.0
    %653 = vmatpush2.msra.mxu0 0.0
    %654 = vmatprep.subr.mxu0 0.0
    %655 = vmatpush2.msra.mxu0 0.0
    %656 = vmatprep.subr.mxu0 0.0
    %657 = vmatpush2.msra.mxu0 0.0
    %658 = vmatprep.subr.mxu0 0.0
    %659 = vmatpush2.msra.mxu0 0.0
    %660 = vmatprep.subr.mxu0 0.0
    %661 = vmatpush2.msra.mxu0 0.0
    %662 = vmatprep.subr.mxu0 0.0
    %663 = vmatpush2.msra.mxu0 0.0
    %664 = vmatprep.mubr.f32.mxu0 0.0
    %665 = vmatmul.mubr.f32.gmra.mxu0 %v579
    %v666 = vpop.f32.mrf.mxu0
    %v667 = vadd.f32 0.0, %v666
    %v668 = vpop.f32.mrf.mxu0
    %669 = vmatprep.mubr.f32.mxu0 0.0
    %670 = vmatmul.mubr.f32.gmra.mxu0 %v580
    %v671 = vpop.f32.mrf.mxu0
    %v672 = vadd.f32 0.0, %v671
    %v673 = vpop.f32.mrf.mxu0
    %674 = vmatprep.mubr.f32.mxu0 0.0
    %675 = vmatmul.mubr.f32.gmra.mxu0 %v581
    %v676 = vpop.f32.mrf.mxu0
    %v677 = vadd.f32 0.0, %v676
    %v678 = vpop.f32.mrf.mxu0
    %679 = vmatprep.mubr.f32.mxu0 0.0
    %680 = vmatmul.mubr.f32.gmra.mxu0 %v582
    %v681 = vpop.f32.mrf.mxu0
    %v682 = vadd.f32 0.0, %v681
    %v683 = vpop.f32.mrf.mxu0
    %684 = vdwg.mxu0
    %685 = vmatprep.subr.mxu0 0.0
    %686 = vmatpush1.msra.mxu0 %v578
    %687 = vmatprep.subr.mxu0 0.0
    %688 = vmatpush1.msra.mxu0 %v577
    %689 = vmatprep.subr.mxu0 0.0
    %690 = vmatpush1.msra.mxu0 %v576
    %691 = vmatprep.subr.mxu0 0.0
    %692 = vmatpush1.msra.mxu0 %v575
    %693 = vmatprep.subr.mxu0 0.0
    %694 = vmatpush1.msra.mxu0 %v574
    %695 = vmatprep.subr.mxu0 0.0
    %696 = vmatpush1.msra.mxu0 %v573
    %697 = vmatprep.subr.mxu0 0.0
    %698 = vmatpush1.msra.mxu0 %v572
    %699 = vmatprep.subr.mxu0 0.0
    %700 = vmatpush1.msra.mxu0 %v571
    %701 = vmatprep.subr.mxu0 0.0
    %702 = vmatpush1.msra.mxu0 %v570
    %703 = vmatprep.subr.mxu0 0.0
    %704 = vmatpush1.msra.mxu0 %v569
    %705 = vmatprep.subr.mxu0 0.0
    %706 = vmatpush1.msra.mxu0 %v568
    %707 = vmatprep.subr.mxu0 0.0
    %708 = vmatpush1.msra.mxu0 %v567
    %709 = vmatprep.subr.mxu0 0.0
    %710 = vmatpush1.msra.mxu0 %v566
    %711 = vmatprep.subr.mxu0 0.0
    %712 = vmatpush1.msra.mxu0 %v565
    %713 = vmatprep.subr.mxu0 0.0
    %714 = vmatpush1.msra.mxu0 %v564
    %715 = vmatprep.subr.mxu0 0.0
    %716 = vmatpush1.msra.mxu0 %v563
    %717 = vmatprep.subr.mxu0 0.0
    %718 = vmatpush2.msra.mxu0 0.0
    %719 = vmatprep.subr.mxu0 0.0
    %720 = vmatpush2.msra.mxu0 0.0
    %721 = vmatprep.subr.mxu0 0.0
    %722 = vmatpush2.msra.mxu0 0.0
    %723 = vmatprep.subr.mxu0 0.0
    %724 = vmatpush2.msra.mxu0 0.0
    %725 = vmatprep.subr.mxu0 0.0
    %726 = vmatpush2.msra.mxu0 0.0
    %727 = vmatprep.subr.mxu0 0.0
    %728 = vmatpush2.msra.mxu0 0.0
    %729 = vmatprep.subr.mxu0 0.0
    %730 = vmatpush2.msra.mxu0 0.0
    %731 = vmatprep.subr.mxu0 0.0
    %732 = vmatpush2.msra.mxu0 0.0
    %733 = vmatprep.subr.mxu0 0.0
    %734 = vmatpush2.msra.mxu0 0.0
    %735 = vmatprep.subr.mxu0 0.0
    %736 = vmatpush2.msra.mxu0 0.0
    %737 = vmatprep.subr.mxu0 0.0
    %738 = vmatpush2.msra.mxu0 0.0
    %739 = vmatprep.subr.mxu0 0.0
    %740 = vmatpush2.msra.mxu0 0.0
    %741 = vmatprep.subr.mxu0 0.0
    %742 = vmatpush2.msra.mxu0 0.0
    %743 = vmatprep.subr.mxu0 0.0
    %744 = vmatpush2.msra.mxu0 0.0
    %745 = vmatprep.subr.mxu0 0.0
    %746 = vmatpush2.msra.mxu0 0.0
    %747 = vmatprep.subr.mxu0 0.0
    %748 = vmatpush2.msra.mxu0 0.0
    %749 = vmatprep.mubr.f32.mxu0 0.0
    %750 = vmatmul.mubr.f32.gmra.mxu0 %v559
    %v751 = vpop.f32.mrf.mxu0
    %v752 = vadd.f32 %v667, %v751
    %v753 = vpop.f32.mrf.mxu0
    %754 = vmatprep.mubr.f32.mxu0 0.0
    %755 = vmatmul.mubr.f32.gmra.mxu0 %v560
    %v756 = vpop.f32.mrf.mxu0
    %v757 = vadd.f32 %v672, %v756
    %v758 = vpop.f32.mrf.mxu0
    %759 = vmatprep.mubr.f32.mxu0 0.0
    %760 = vmatmul.mubr.f32.gmra.mxu0 %v561
    %v761 = vpop.f32.mrf.mxu0
    %v762 = vadd.f32 %v677, %v761
    %v763 = vpop.f32.mrf.mxu0
    %764 = vmatprep.mubr.f32.mxu0 0.0
    %765 = vmatmul.mubr.f32.gmra.mxu0 %v562
    %v766 = vpop.f32.mrf.mxu0
    %v767 = vadd.f32 %v682, %v766
    %v768 = vpop.f32.mrf.mxu0
    %769 = vdwg.mxu0
    %v770 = vld [vmem:[#allocation3 + $0x2] sm:$0xff]
    %v771 = vld [vmem:[#allocation3 + $0xa] sm:$0xff]
    %v772 = vld [vmem:[#allocation3 + $0x1a] sm:$0xff]
    %v773 = vld [vmem:[#allocation3 + $0x22] sm:$0xff]
    %s774 = scalar_lea.vmem %s2, 256
    %v775 = vld [vmem:[%s774] sm:$0xff]
    %v776 = vld [vmem:[%s774 + $0x8] sm:$0xff]
    %v777 = vld [vmem:[%s774 + $0x10] sm:$0xff]
    %v778 = vld [vmem:[%s774 + $0x18] sm:$0xff]
    %v779 = vld [vmem:[%s774 + $0x20] sm:$0xff]
    %v780 = vld [vmem:[%s774 + $0x28] sm:$0xff]
    %v781 = vld [vmem:[%s774 + $0x30] sm:$0xff]
    %v782 = vld [vmem:[%s774 + $0x38] sm:$0xff]
    %v783 = vld [vmem:[%s774 + $0x40] sm:$0xff]
    %v784 = vld [vmem:[%s774 + $0x48] sm:$0xff]
    %v785 = vld [vmem:[%s774 + $0x50] sm:$0xff]
    %v786 = vld [vmem:[%s774 + $0x58] sm:$0xff]
    %v787 = vld [vmem:[%s774 + $0x60] sm:$0xff]
    %v788 = vld [vmem:[%s774 + $0x68] sm:$0xff]
    %v789 = vld [vmem:[%s774 + $0x70] sm:$0xff]
    %v790 = vld [vmem:[%s774 + $0x78] sm:$0xff]
    %791 = vmatprep.subr.mxu0 0.0
    %792 = vmatpush1.msra.mxu0 %v790
    %793 = vmatprep.subr.mxu0 0.0
    %794 = vmatpush1.msra.mxu0 %v789
    %795 = vmatprep.subr.mxu0 0.0
    %796 = vmatpush1.msra.mxu0 %v788
    %797 = vmatprep.subr.mxu0 0.0
    %798 = vmatpush1.msra.mxu0 %v787
    %799 = vmatprep.subr.mxu0 0.0
    %800 = vmatpush1.msra.mxu0 %v786
    %801 = vmatprep.subr.mxu0 0.0
    %802 = vmatpush1.msra.mxu0 %v785
    %803 = vmatprep.subr.mxu0 0.0
    %804 = vmatpush1.msra.mxu0 %v784
    %805 = vmatprep.subr.mxu0 0.0
    %806 = vmatpush1.msra.mxu0 %v783
    %807 = vmatprep.subr.mxu0 0.0
    %808 = vmatpush1.msra.mxu0 %v782
    %809 = vmatprep.subr.mxu0 0.0
    %810 = vmatpush1.msra.mxu0 %v781
    %811 = vmatprep.subr.mxu0 0.0
    %812 = vmatpush1.msra.mxu0 %v780
    %813 = vmatprep.subr.mxu0 0.0
    %814 = vmatpush1.msra.mxu0 %v779
    %815 = vmatprep.subr.mxu0 0.0
    %816 = vmatpush1.msra.mxu0 %v778
    %817 = vmatprep.subr.mxu0 0.0
    %818 = vmatpush1.msra.mxu0 %v777
    %819 = vmatprep.subr.mxu0 0.0
    %820 = vmatpush1.msra.mxu0 %v776
    %821 = vmatprep.subr.mxu0 0.0
    %822 = vmatpush1.msra.mxu0 %v775
    %823 = vmatprep.subr.mxu0 0.0
    %824 = vmatpush2.msra.mxu0 0.0
    %825 = vmatprep.subr.mxu0 0.0
    %826 = vmatpush2.msra.mxu0 0.0
    %827 = vmatprep.subr.mxu0 0.0
    %828 = vmatpush2.msra.mxu0 0.0
    %829 = vmatprep.subr.mxu0 0.0
    %830 = vmatpush2.msra.mxu0 0.0
    %831 = vmatprep.subr.mxu0 0.0
    %832 = vmatpush2.msra.mxu0 0.0
    %833 = vmatprep.subr.mxu0 0.0
    %834 = vmatpush2.msra.mxu0 0.0
    %835 = vmatprep.subr.mxu0 0.0
    %836 = vmatpush2.msra.mxu0 0.0
    %837 = vmatprep.subr.mxu0 0.0
    %838 = vmatpush2.msra.mxu0 0.0
    %839 = vmatprep.subr.mxu0 0.0
    %840 = vmatpush2.msra.mxu0 0.0
    %841 = vmatprep.subr.mxu0 0.0
    %842 = vmatpush2.msra.mxu0 0.0
    %843 = vmatprep.subr.mxu0 0.0
    %844 = vmatpush2.msra.mxu0 0.0
    %845 = vmatprep.subr.mxu0 0.0
    %846 = vmatpush2.msra.mxu0 0.0
    %847 = vmatprep.subr.mxu0 0.0
    %848 = vmatpush2.msra.mxu0 0.0
    %849 = vmatprep.subr.mxu0 0.0
    %850 = vmatpush2.msra.mxu0 0.0
    %851 = vmatprep.subr.mxu0 0.0
    %852 = vmatpush2.msra.mxu0 0.0
    %853 = vmatprep.subr.mxu0 0.0
    %854 = vmatpush2.msra.mxu0 0.0
    %855 = vmatprep.mubr.f32.mxu0 0.0
    %856 = vmatmul.mubr.f32.gmra.mxu0 %v770
    %v857 = vpop.f32.mrf.mxu0
    %v858 = vadd.f32 0.0, %v857
    %v859 = vpop.f32.mrf.mxu0
    %860 = vmatprep.mubr.f32.mxu0 0.0
    %861 = vmatmul.mubr.f32.gmra.mxu0 %v771
    %v862 = vpop.f32.mrf.mxu0
    %v863 = vadd.f32 0.0, %v862
    %v864 = vpop.f32.mrf.mxu0
    %865 = vmatprep.mubr.f32.mxu0 0.0
    %866 = vmatmul.mubr.f32.gmra.mxu0 %v772
    %v867 = vpop.f32.mrf.mxu0
    %v868 = vadd.f32 0.0, %v867
    %v869 = vpop.f32.mrf.mxu0
    %870 = vmatprep.mubr.f32.mxu0 0.0
    %871 = vmatmul.mubr.f32.gmra.mxu0 %v773
    %v872 = vpop.f32.mrf.mxu0
    %v873 = vadd.f32 0.0, %v872
    %v874 = vpop.f32.mrf.mxu0
    %875 = vdwg.mxu0
    %v876 = vadd.f32 %v752, %v858
    %v877 = vadd.f32 %v757, %v863
    %v878 = vadd.f32 %v762, %v868
    %v879 = vadd.f32 %v767, %v873
    %v880 = vld [vmem:[%s5] sm:$0x1]
    %v882 = vlaneseq
    %v883 = vshrl.u32 %v882, 7
    %v884 = vsub.s32 0, %v883
    %v885 = vrot.slane %v880, %v884
    %v887 = vmul.f32 %v876, %v885
    %v888 = vmul.f32 %v877, %v885
    %v889 = vmul.f32 %v878, %v885
    %v890 = vmul.f32 %v879, %v885
    %v891 = vld [vmem:[%s6] sm:$0x1]
    %v893 = vlaneseq
    %v894 = vshrl.u32 %v893, 7
    %v895 = vsub.s32 0, %v894
    %v896 = vrot.slane %v891, %v895
    %v898 = vadd.f32 %v887, %v896
    %v899 = vadd.f32 %v888, %v896
    %v900 = vadd.f32 %v889, %v896
    %v901 = vadd.f32 %v890, %v896
    %v902 = vadd.f32 %v898, %v547
    %v903 = vadd.f32 %v899, %v548
    %v904 = vadd.f32 %v900, %v549
    %v905 = vadd.f32 %v901, %v550
    %v906 = vmax.f32 %v902, 0.0
    %v907 = vmax.f32 %v903, 0.0
    %v908 = vmax.f32 %v904, 0.0
    %v909 = vmax.f32 %v905, 0.0
    %910 = vst [vmem:[%s10] sm:$0xff] %v906
    %911 = vst [vmem:[%s10 + $0x8] sm:$0xff] %v907
    %912 = vst [vmem:[%s10 + $0x10] sm:$0xff] %v908
    %913 = vst [vmem:[%s10 + $0x18] sm:$0xff] %v909
    // Predicated region
    $region50: #{fwd.1} parent=1 // pred_check
      _
    $region51: #{fwd.1} parent=1 // pred_check_branch
      %915 = sbr.rel (0) target = $region53
    $region52: #{fwd.1} parent=1 // pred_region
      _
    $region53: #{fwd.1} parent=1 // pred_fallthru
      _
    // Predicated region
    $region54: #{fwd.1} parent=1 // pred_check
      _
    $region55: #{fwd.1} parent=1 // pred_check_branch
      %917 = sbr.rel (0) target = $region57
    $region56: #{fwd.1} parent=1 // pred_region
      _
    $region57: #{fwd.1} parent=1 // pred_fallthru
      _
    %918 = vsyncpa [#allocation5], 1
    %919 = vsyncpa [#allocation7], 1

</llo_original>
